<compile_context>
chip_gen: v5e
topology: v5e:2x2
jax: 0.10.0
libtpu: 0.0.40
codegen_flags: <defaults>
</compile_context>

<pallas_src>
import jax
import jax.numpy as jnp
from jax.experimental import pallas as pl
from jax.experimental.pallas import tpu as pltpu


# --------------------------------------------------------------------------- #
# Kernel
# --------------------------------------------------------------------------- #
def _atomwise_kernel(xf_ref, w1f_ref, b1f_ref, w2f_ref, w3f_ref, b23f_ref,
                     out_ref):
    """Fused 2-layer MLP (SiLU) + linear skip on a folded, lane-dense tile.

    xf_ref : (tile_r, fold*n_in)   -- `fold` atoms packed per row (lane-dense)
    w1f/w2f/w3f : block-diagonal folded weights, b1f/b23f folded biases.
    out_ref: (tile_r, fold*n_out)  -- `fold` atom outputs per row.
    """
    xf = xf_ref[...].astype(jnp.float32)                     # lane-dense load

    # Hidden layer: block-diagonal W1 applies the real W1 to each packed atom.
    hf = jnp.dot(xf, w1f_ref[...], preferred_element_type=jnp.float32)
    hf = hf + b1f_ref[...]                                   # (1, Fh) bcast
    hf = hf * jax.nn.sigmoid(hf)                             # SiLU / swish

    # Output layer + linear skip: two small MXU ops, no concat materialization.
    yf = jnp.dot(hf, w2f_ref[...], preferred_element_type=jnp.float32)
    yf = yf + jnp.dot(xf, w3f_ref[...], preferred_element_type=jnp.float32)
    yf = yf + b23f_ref[...]                                  # fused b2+b3

    out_ref[...] = yf.astype(out_ref.dtype)


# --------------------------------------------------------------------------- #
# Wrapper helpers
# --------------------------------------------------------------------------- #
def _round_up(x: int, m: int) -> int:
    return ((x + m - 1) // m) * m


def _num_tensorcores() -> int:
    """Best-effort TensorCore-per-chip count (2 on v7x, 1 on v5e/v6e)."""
    try:
        info = pltpu.get_tpu_info()
    except Exception:
        return 1
    for attr in ("num_cores", "core_count", "num_tensorcores",
                 "tensorcores_per_chip", "cores_per_chip"):
        v = getattr(info, attr, None)
        if isinstance(v, int) and v > 0:
            return v
    return 1


def _pick_tile_rows(n_rows: int, *, max_rows: int, num_cores: int) -> int:
    """Largest useful tile (multiple of 8 sublanes); split only for megacore."""
    tile = min(max_rows, _round_up(n_rows, 8))
    if num_cores > 1 and pl.cdiv(n_rows, tile) < num_cores and n_rows > 8:
        # Only on multi-core chips: ensure >= num_cores (balanced) grid steps
        # so dimension_semantics=("parallel",) can shard across TensorCores.
        tile = max(8, _round_up(pl.cdiv(n_rows, num_cores), 8))
    return tile


# --------------------------------------------------------------------------- #
# Forward pass
# --------------------------------------------------------------------------- #
def atomwise_forward(desc, params, batch=None, *, max_rows_per_tile=4096):
    """Atomwise forward pass via pallas_call.

    desc:   (n_atoms, n_in) float32 (bf16 also accepted; kernel upcasts)
    params: w1 (n_in, n_hid), b1 (1, n_hid), w2 (n_hid, n_out), b2 (1, n_out),
            w3 (n_in, n_out),  b3 (1, n_out)
    batch:  unused (interface parity with the torch module's forward).
    returns (n_atoms, n_out) float32
    """
    del batch  # unused by the torch forward as well
    n_atoms, n_in = desc.shape
    n_hid = params["w1"].shape[1]
    n_out = params["w2"].shape[1]
    assert params["w1"].shape == (n_in, n_hid)
    assert params["w3"].shape == (n_in, n_out)

    # Fold factor: pack `fold` atoms per 128-lane row when n_in divides 128.
    fold = 128 // n_in if (0 < n_in <= 128 and 128 % n_in == 0) else 1

    n_pad = (-n_atoms) % fold
    if n_pad:
        # Only <= fold-1 zero rows, and only when n_atoms is not a multiple of
        # the fold factor; this is the single remaining wrapper-side copy.
        desc = jnp.pad(desc, ((0, n_pad), (0, 0)))
    n_rows = (n_atoms + n_pad) // fold
    fin, fh, fout = fold * n_in, fold * n_hid, fold * n_out

    # Contiguous row-major reshape: metadata-only, no HBM pass.
    desc_f = desc.reshape(n_rows, fin)

    # One-time tiny parameter prep: block-diagonal folded weights + biases.
    eye = jnp.eye(fold, dtype=jnp.float32)
    w1f = jnp.kron(eye, params["w1"].astype(jnp.float32))        # (fin, fh)
    w2f = jnp.kron(eye, params["w2"].astype(jnp.float32))        # (fh, fout)
    w3f = jnp.kron(eye, params["w3"].astype(jnp.float32))        # (fin, fout)
    b1f = jnp.tile(params["b1"].reshape(1, n_hid).astype(jnp.float32),
                   (1, fold))                                     # (1, fh)
    b23f = jnp.tile((params["b2"] + params["b3"]).reshape(1, n_out)
                    .astype(jnp.float32), (1, fold))              # (1, fout)

    tile_r = _pick_tile_rows(n_rows, max_rows=max_rows_per_tile,
                             num_cores=_num_tensorcores())
    num_tiles = pl.cdiv(n_rows, tile_r)   # last block may be partial: Pallas
                                          # pads OOB reads / drops OOB writes.

    full = lambda shape: pl.BlockSpec(shape, lambda i: (0, 0))

    out = pl.pallas_call(
        _atomwise_kernel,
        out_shape=jax.ShapeDtypeStruct((n_rows, fout), jnp.float32),
        grid_spec=pltpu.PrefetchScalarGridSpec(
            num_scalar_prefetch=0,
            grid=(num_tiles,),
            in_specs=[
                pl.BlockSpec((tile_r, fin), lambda i: (i, 0)),   # folded desc
                full((fin, fh)),                                 # W1 (blockdiag)
                full((1, fh)),                                   # b1 (tiled)
                full((fh, fout)),                                # W2 (blockdiag)
                full((fin, fout)),                               # W3 (blockdiag)
                full((1, fout)),                                 # b2 + b3 (tiled)
            ],
            out_specs=pl.BlockSpec((tile_r, fout), lambda i: (i, 0)),
        ),
        compiler_params=pltpu.CompilerParams(
            dimension_semantics=("parallel",),
            vmem_limit_bytes=32 * 1024 * 1024),
    )(desc_f, w1f, b1f, w2f, w3f, b23f)

    # (n_rows, fold*n_out) -> (n_rows*fold, n_out); drop the <= fold-1 pad rows.
    return out.reshape(n_rows * fold, n_out)[:n_atoms]


# --------------------------------------------------------------------------- #
# Reference and parameter init
# --------------------------------------------------------------------------- #
def init_params(key, n_in, n_out, n_hid):
    """Deterministic synthetic parameter init (mimics Dense layer shapes)."""
    k1, k2, k3, k4, k5, k6 = jax.random.split(key, 6)
    s1 = 1.0 / jnp.sqrt(n_in)
    s2 = 1.0 / jnp.sqrt(n_hid)
    return {
        "w1": jax.random.uniform(k1, (n_in, n_hid), jnp.float32, -s1, s1),
        "b1": jax.random.uniform(k2, (1, n_hid), jnp.float32, -s1, s1),
        "w2": jax.random.uniform(k3, (n_hid, n_out), jnp.float32, -s2, s2),
        "b2": jax.random.uniform(k4, (1, n_out), jnp.float32, -s2, s2),
        "w3": jax.random.uniform(k5, (n_in, n_out), jnp.float32, -s1, s1),
        "b3": jax.random.uniform(k6, (1, n_out), jnp.float32, -s1, s1),
    }


def atomwise_reference(desc, params):
    """Pure-JAX reference of the same forward pass."""
    h = desc @ params["w1"] + params["b1"]
    h = h * jax.nn.sigmoid(h)
    y = h @ params["w2"] + params["b2"]
    y = y + desc @ params["w3"] + params["b3"]
    return y


if __name__ == "__main__":
    # Module config: n_in=32, n_out=1, n_layers=2, n_hidden=None -> pyramidal
    # hidden width = n_in // 2 = 16; add_linear_nn=True, bias=True.
    n_in, n_out = 32, 1
    n_hid = n_in // 2

    key = jax.random.PRNGKey(0)
    k1, k2, k3, k4, k_params = jax.random.split(key, 5)
    params = init_params(k_params, n_in, n_out, n_hid)

    ok = True

    # Case 1: small, fold-divisible, single exact block.
    desc1 = jax.random.normal(k1, (64, n_in), jnp.float32)
    batch1 = jnp.zeros((64,), jnp.int32)  # unused; interface parity with torch
    y1 = jax.block_until_ready(atomwise_forward(desc1, params, batch1))
    ok &= y1.shape == (64, n_out) and bool(
        jnp.allclose(y1, atomwise_reference(desc1, params), atol=1e-5, rtol=1e-5))

    # Case 2: fold-divisible but rows not a multiple of 8 -> partial last block
    # handled by Pallas (no wrapper padding copy).
    desc2 = jax.random.normal(k2, (300, n_in), jnp.float32)
    y2 = jax.block_until_ready(atomwise_forward(desc2, params))
    ok &= y2.shape == (300, n_out) and bool(
        jnp.allclose(y2, atomwise_reference(desc2, params), atol=1e-5, rtol=1e-5))

    # Case 3: n_atoms not a multiple of the fold factor -> small (<=3 row) pad.
    desc3 = jax.random.normal(k3, (61, n_in), jnp.float32)
    y3 = jax.block_until_ready(atomwise_forward(desc3, params))
    ok &= y3.shape == (61, n_out) and bool(
        jnp.allclose(y3, atomwise_reference(desc3, params), atol=1e-5, rtol=1e-5))

    # Case 4: bf16 descriptor ingest (kernel upcasts); reference fed the same
    # rounded input so the comparison stays tight.
    desc4 = jax.random.normal(k4, (128, n_in), jnp.float32).astype(jnp.bfloat16)
    y4 = jax.block_until_ready(atomwise_forward(desc4, params))
    y4_ref = atomwise_reference(desc4.astype(jnp.float32), params)
    ok &= y4.shape == (128, n_out) and bool(
        jnp.allclose(y4, y4_ref, atol=1e-4, rtol=1e-4))

    assert ok
    print("KERNEL_OK")
</pallas_src>

<mosaic_0001>
module attributes {stable_mosaic.version = 11 : i64} {
  func.func @_atomwise_kernel(%arg0: i32, %arg1: memref<16x128xf32, #tpu.memory_space<vmem>>, %arg2: memref<128x64xf32, #tpu.memory_space<vmem>>, %arg3: memref<1x64xf32, #tpu.memory_space<vmem>>, %arg4: memref<64x4xf32, #tpu.memory_space<vmem>>, %arg5: memref<128x4xf32, #tpu.memory_space<vmem>>, %arg6: memref<1x4xf32, #tpu.memory_space<vmem>>, %arg7: memref<16x4xf32, #tpu.memory_space<vmem>>) attributes {dimension_semantics = [#tpu.dimension_semantics<parallel>], iteration_bounds = array<i64: 1>, scalar_prefetch = 0 : i64, scratch_operands = 0 : i64, tpu.core_type = #tpu.core_type<tc>, window_params = [{transform_indices = @transform_0, window_bounds = array<i64: 16, 128>}, {pipeline_mode = #tpu.pipeline_mode<synchronous>, transform_indices = @transform_1, window_bounds = array<i64: 128, 64>}, {pipeline_mode = #tpu.pipeline_mode<synchronous>, transform_indices = @transform_2, window_bounds = array<i64: 1, 64>}, {pipeline_mode = #tpu.pipeline_mode<synchronous>, transform_indices = @transform_3, window_bounds = array<i64: 64, 4>}, {pipeline_mode = #tpu.pipeline_mode<synchronous>, transform_indices = @transform_4, window_bounds = array<i64: 128, 4>}, {pipeline_mode = #tpu.pipeline_mode<synchronous>, transform_indices = @transform_5, window_bounds = array<i64: 1, 4>}, {transform_indices = @transform_6, window_bounds = array<i64: 16, 4>}]} {
    %c0 = arith.constant 0 : index
    %c0_0 = arith.constant 0 : index
    %0 = vector.load %arg1[%c0, %c0_0] : memref<16x128xf32, #tpu.memory_space<vmem>>, vector<16x128xf32>
    %c0_1 = arith.constant 0 : index
    %c0_2 = arith.constant 0 : index
    %1 = vector.load %arg2[%c0_1, %c0_2] : memref<128x64xf32, #tpu.memory_space<vmem>>, vector<128x64xf32>
    %cst = arith.constant dense<0.000000e+00> : vector<16x64xf32>
    %2 = tpu.matmul %0, %1, %cst {dimension_numbers = #tpu.dot_dimension_numbers<[1], [0], [0], [1], [0, 0, 1, 1], [], []>} : vector<16x128xf32>, vector<128x64xf32>, vector<16x64xf32> -> vector<16x64xf32>
    %c0_3 = arith.constant 0 : index
    %c0_4 = arith.constant 0 : index
    %3 = vector.load %arg3[%c0_3, %c0_4] : memref<1x64xf32, #tpu.memory_space<vmem>>, vector<1x64xf32>
    %4 = vector.broadcast %3 : vector<1x64xf32> to vector<16x64xf32>
    %5 = arith.addf %2, %4 : vector<16x64xf32>
    %6 = arith.negf %5 : vector<16x64xf32>
    %7 = math.exp %6 : vector<16x64xf32>
    %cst_5 = arith.constant 1.000000e+00 : f32
    %8 = vector.broadcast %cst_5 : f32 to vector<16x64xf32>
    %9 = arith.addf %8, %7 : vector<16x64xf32>
    %10 = arith.divf %8, %9 : vector<16x64xf32>
    %11 = arith.mulf %5, %10 : vector<16x64xf32>
    %c0_6 = arith.constant 0 : index
    %c0_7 = arith.constant 0 : index
    %12 = vector.load %arg4[%c0_6, %c0_7] : memref<64x4xf32, #tpu.memory_space<vmem>>, vector<64x4xf32>
    %cst_8 = arith.constant dense<0.000000e+00> : vector<16x4xf32>
    %13 = tpu.matmul %11, %12, %cst_8 {dimension_numbers = #tpu.dot_dimension_numbers<[1], [0], [0], [1], [0, 0, 1, 1], [], []>} : vector<16x64xf32>, vector<64x4xf32>, vector<16x4xf32> -> vector<16x4xf32>
    %c0_9 = arith.constant 0 : index
    %c0_10 = arith.constant 0 : index
    %14 = vector.load %arg5[%c0_9, %c0_10] : memref<128x4xf32, #tpu.memory_space<vmem>>, vector<128x4xf32>
    %cst_11 = arith.constant dense<0.000000e+00> : vector<16x4xf32>
    %15 = tpu.matmul %0, %14, %cst_11 {dimension_numbers = #tpu.dot_dimension_numbers<[1], [0], [0], [1], [0, 0, 1, 1], [], []>} : vector<16x128xf32>, vector<128x4xf32>, vector<16x4xf32> -> vector<16x4xf32>
    %16 = arith.addf %13, %15 : vector<16x4xf32>
    %c0_12 = arith.constant 0 : index
    %c0_13 = arith.constant 0 : index
    %17 = vector.load %arg6[%c0_12, %c0_13] : memref<1x4xf32, #tpu.memory_space<vmem>>, vector<1x4xf32>
    %18 = vector.broadcast %17 : vector<1x4xf32> to vector<16x4xf32>
    %19 = arith.addf %16, %18 : vector<16x4xf32>
    %c0_14 = arith.constant 0 : index
    %c0_15 = arith.constant 0 : index
    %20 = vector.load %arg7[%c0_14, %c0_15] : memref<16x4xf32, #tpu.memory_space<vmem>>, vector<16x4xf32>
    tpu.vector_store %arg7[%c0_14, %c0_15], %19 {strides = array<i32>} : memref<16x4xf32, #tpu.memory_space<vmem>>, vector<16x4xf32>,
    return
  }
  func.func @transform_0(%arg0: i32) -> (i32, i32) {
    %c0_i32 = arith.constant 0 : i32
    %c0_i32_0 = arith.constant 0 : i32
    return %arg0, %c0_i32 : i32, i32
  }
  func.func @transform_1(%arg0: i32) -> (i32, i32) {
    %c0_i32 = arith.constant 0 : i32
    %c0_i32_0 = arith.constant 0 : i32
    %c0_i32_1 = arith.constant 0 : i32
    return %c0_i32, %c0_i32_0 : i32, i32
  }
  func.func @transform_2(%arg0: i32) -> (i32, i32) {
    %c0_i32 = arith.constant 0 : i32
    %c0_i32_0 = arith.constant 0 : i32
    %c0_i32_1 = arith.constant 0 : i32
    return %c0_i32, %c0_i32_0 : i32, i32
  }
  func.func @transform_3(%arg0: i32) -> (i32, i32) {
    %c0_i32 = arith.constant 0 : i32
    %c0_i32_0 = arith.constant 0 : i32
    %c0_i32_1 = arith.constant 0 : i32
    return %c0_i32, %c0_i32_0 : i32, i32
  }
  func.func @transform_4(%arg0: i32) -> (i32, i32) {
    %c0_i32 = arith.constant 0 : i32
    %c0_i32_0 = arith.constant 0 : i32
    %c0_i32_1 = arith.constant 0 : i32
    return %c0_i32, %c0_i32_0 : i32, i32
  }
  func.func @transform_5(%arg0: i32) -> (i32, i32) {
    %c0_i32 = arith.constant 0 : i32
    %c0_i32_0 = arith.constant 0 : i32
    %c0_i32_1 = arith.constant 0 : i32
    return %c0_i32, %c0_i32_0 : i32, i32
  }
  func.func @transform_6(%arg0: i32) -> (i32, i32) {
    %c0_i32 = arith.constant 0 : i32
    %c0_i32_0 = arith.constant 0 : i32
    return %arg0, %c0_i32 : i32, i32
  }
}

</mosaic_0001>

<llo_original>
// kernel: tpu_custom_call.1
$region0: #{tpu_custom_call.1}
  #allocation0 [shape = 'u32[]', space=smem, size = 0x4, offset = 0x4, fixed_abs, tag = 'smem constant byte address 0x4 - core index']
  #allocation1 [shape = 'u32[72,128]{1,0:T(1,128)}', space=vmem, size = 0x9000, scoped, tag = 'internal scratch']
  %s0 = inlined_call_operand.vmem [shape: f32[16,128], index: 0, kind: input, shape index: {}]
  %s1 = inlined_call_operand.vmem [shape: f32[128,64], index: 1, kind: input, shape index: {}]
  %s2 = inlined_call_operand.vmem [shape: f32[1,64], index: 2, kind: input, shape index: {}]
  %s3 = inlined_call_operand.vmem [shape: f32[64,4], index: 3, kind: input, shape index: {}]
  %s4 = inlined_call_operand.vmem [shape: f32[128,4], index: 4, kind: input, shape index: {}]
  %s5 = inlined_call_operand.vmem [shape: f32[1,4], index: 5, kind: input, shape index: {}]
  %s6 = inlined_call_operand.vmem [shape: f32[16,4], index: 6, kind: output, shape index: {}]
  %s7 = sld [smem:[#allocation0]]
  $region34: #{tpu_custom_call.1} parent=0
    _
  %s9 = ssub.s32 1, %s7
  %s10 = scalar_select 0, %s9, %s7
  // Predicated region
  $region2: #{tpu_custom_call.1} parent=0 // pred_check
    _
  $region3: #{tpu_custom_call.1} parent=0 // pred_check_branch
    %12 = sbr.rel (0) target = $region5
  $region4: #{tpu_custom_call.1} parent=0 // pred_region
    _
  $region5: #{tpu_custom_call.1} parent=0 // pred_fallthru
    _
  // Predicated region
  $region6: #{tpu_custom_call.1} parent=0 // pred_check
    _
  $region7: #{tpu_custom_call.1} parent=0 // pred_check_branch
    %14 = sbr.rel (0) target = $region9
  $region8: #{tpu_custom_call.1} parent=0 // pred_region
    _
  $region9: #{tpu_custom_call.1} parent=0 // pred_fallthru
    _
  // Predicated region
  $region10: #{tpu_custom_call.1} parent=0 // pred_check
    _
  $region11: #{tpu_custom_call.1} parent=0 // pred_check_branch
    %16 = sbr.rel (0) target = $region13
  $region12: #{tpu_custom_call.1} parent=0 // pred_region
    _
  $region13: #{tpu_custom_call.1} parent=0 // pred_fallthru
    _
  // Predicated region
  $region14: #{tpu_custom_call.1} parent=0 // pred_check
    _
  $region15: #{tpu_custom_call.1} parent=0 // pred_check_branch
    %18 = sbr.rel (0) target = $region17
  $region16: #{tpu_custom_call.1} parent=0 // pred_region
    _
  $region17: #{tpu_custom_call.1} parent=0 // pred_fallthru
    _
  // Predicated region
  $region18: #{tpu_custom_call.1} parent=0 // pred_check
    _
  $region19: #{tpu_custom_call.1} parent=0 // pred_check_branch
    %20 = sbr.rel (0) target = $region21
  $region20: #{tpu_custom_call.1} parent=0 // pred_region
    _
  $region21: #{tpu_custom_call.1} parent=0 // pred_fallthru
    _
  // Predicated region
  $region22: #{tpu_custom_call.1} parent=0 // pred_check
    _
  $region23: #{tpu_custom_call.1} parent=0 // pred_check_branch
    %22 = sbr.rel (0) target = $region25
  $region24: #{tpu_custom_call.1} parent=0 // pred_region
    _
  $region25: #{tpu_custom_call.1} parent=0 // pred_fallthru
    _
  %v23 = vld [vmem:[%s0] sm:$0xff]
  %v24 = vld [vmem:[%s0 + $0x8] sm:$0xff]
  %v25 = vld [vmem:[%s1] sm:$0xff]
  %v26 = vld [vmem:[%s1 + $0x8] sm:$0xff]
  %v27 = vld [vmem:[%s1 + $0x10] sm:$0xff]
  %v28 = vld [vmem:[%s1 + $0x18] sm:$0xff]
  %v29 = vld [vmem:[%s1 + $0x20] sm:$0xff]
  %v30 = vld [vmem:[%s1 + $0x28] sm:$0xff]
  %v31 = vld [vmem:[%s1 + $0x30] sm:$0xff]
  %v32 = vld [vmem:[%s1 + $0x38] sm:$0xff]
  %v33 = vld [vmem:[%s1 + $0x40] sm:$0xff]
  %v34 = vld [vmem:[%s1 + $0x48] sm:$0xff]
  %v35 = vld [vmem:[%s1 + $0x50] sm:$0xff]
  %v36 = vld [vmem:[%s1 + $0x58] sm:$0xff]
  %v37 = vld [vmem:[%s1 + $0x60] sm:$0xff]
  %v38 = vld [vmem:[%s1 + $0x68] sm:$0xff]
  %v39 = vld [vmem:[%s1 + $0x70] sm:$0xff]
  %v40 = vld [vmem:[%s1 + $0x78] sm:$0xff]
  %v41 = vld [vmem:[%s2] sm:$0x1]
  %v43 = vperm.slane %v41, 0
  %45 = vmatpush.msra.mxu0 %v40
  %46 = vmatpush.msra.mxu0 %v39
  %47 = vmatpush.msra.mxu0 %v38
  %48 = vmatpush.msra.mxu0 %v37
  %49 = vmatpush.msra.mxu0 %v36
  %50 = vmatpush.msra.mxu0 %v35
  %51 = vmatpush.msra.mxu0 %v34
  %52 = vmatpush.msra.mxu0 %v33
  %53 = vmatpush.msra.mxu0 %v32
  %54 = vmatpush.msra.mxu0 %v31
  %55 = vmatpush.msra.mxu0 %v30
  %56 = vmatpush.msra.mxu0 %v29
  %57 = vmatpush.msra.mxu0 %v28
  %58 = vmatpush.msra.mxu0 %v27
  %59 = vmatpush.msra.mxu0 %v26
  %60 = vmatpush.msra.mxu0 %v25
  %61 = vmatmul.f32.gmra.mxu0 %v23
  %v62 = vpop.f32.mrf.mxu0
  %v63 = vadd.f32 %v43, %v62
  %64 = vmatmul.f32.gmra.mxu0 %v24
  %v65 = vpop.f32.mrf.mxu0
  %v66 = vadd.f32 %v43, %v65
  %67 = vdwg.mxu0
  %v68 = vxor.u32 %v63, 2147483648
  %v69 = vxor.u32 %v66, 2147483648
  %v70 = vmul.f32 %v68, 1.442695
  %v71 = vpow.pop %v70
  %v72 = vmul.f32 %v69, 1.442695
  %v73 = vpow.pop %v72
  %v74 = vadd.f32 %v71, 1.0
  %v75 = vadd.f32 %v73, 1.0
  %v76 = vrcp.pop %v74
  %v77 = vmul.f32 %v74, %v76
  %v78 = vsub.f32 1.0, %v77
  %v79 = vmul.f32 %v76, %v78
  %v80 = vadd.f32 %v76, %v79
  %vm81 = vweird.f32 %v74
  %vm82 = vweird.f32 %v76
  %vm83 = vmor %vm81, %vm82
  %v84 = vsel %vm83, %v76, %v80
  %v85 = vand.u32 2147483647, %v74
  %vm86 = vcmp.eq.f32.partialorder %v85, 8.507059e+37
  %v87 = vand.u32 %v74, 2147483648
  %v88 = vor.u32 1.1754944e-38, %v87
  %v89 = vsel %vm86, %v88, %v84
  %v90 = vmul.f32 1.0, %v89
  %v91 = vrcp.pop %v75
  %v92 = vmul.f32 %v75, %v91
  %v93 = vsub.f32 1.0, %v92
  %v94 = vmul.f32 %v91, %v93
  %v95 = vadd.f32 %v91, %v94
  %vm96 = vweird.f32 %v75
  %vm97 = vweird.f32 %v91
  %vm98 = vmor %vm96, %vm97
  %v99 = vsel %vm98, %v91, %v95
  %v100 = vand.u32 2147483647, %v75
  %vm101 = vcmp.eq.f32.partialorder %v100, 8.507059e+37
  %v102 = vand.u32 %v75, 2147483648
  %v103 = vor.u32 1.1754944e-38, %v102
  %v104 = vsel %vm101, %v103, %v99
  %v105 = vmul.f32 1.0, %v104
  %v106 = vmul.f32 %v63, %v90
  %v107 = vmul.f32 %v66, %v105
  %v108 = vld [vmem:[%s3] sm:$0xff]
  %v109 = vld [vmem:[%s3 + $0x8] sm:$0xff]
  %v110 = vld [vmem:[%s3 + $0x10] sm:$0xff]
  %v111 = vld [vmem:[%s3 + $0x18] sm:$0xff]
  %v112 = vld [vmem:[%s3 + $0x20] sm:$0xff]
  %v113 = vld [vmem:[%s3 + $0x28] sm:$0xff]
  %v114 = vld [vmem:[%s3 + $0x30] sm:$0xff]
  %v115 = vld [vmem:[%s3 + $0x38] sm:$0xff]
  %v116 = vld [vmem:[%s4] sm:$0xff]
  %v117 = vld [vmem:[%s4 + $0x8] sm:$0xff]
  %v118 = vld [vmem:[%s4 + $0x10] sm:$0xff]
  %v119 = vld [vmem:[%s4 + $0x18] sm:$0xff]
  %v120 = vld [vmem:[%s4 + $0x20] sm:$0xff]
  %v121 = vld [vmem:[%s4 + $0x28] sm:$0xff]
  %v122 = vld [vmem:[%s4 + $0x30] sm:$0xff]
  %v123 = vld [vmem:[%s4 + $0x38] sm:$0xff]
  %v124 = vld [vmem:[%s4 + $0x40] sm:$0xff]
  %v125 = vld [vmem:[%s4 + $0x48] sm:$0xff]
  %v126 = vld [vmem:[%s4 + $0x50] sm:$0xff]
  %v127 = vld [vmem:[%s4 + $0x58] sm:$0xff]
  %v128 = vld [vmem:[%s4 + $0x60] sm:$0xff]
  %v129 = vld [vmem:[%s4 + $0x68] sm:$0xff]
  %v130 = vld [vmem:[%s4 + $0x70] sm:$0xff]
  %v131 = vld [vmem:[%s4 + $0x78] sm:$0xff]
  %132 = vmatpush.msra.mxu0 %v131
  %133 = vmatpush.msra.mxu0 %v130
  %134 = vmatpush.msra.mxu0 %v129
  %135 = vmatpush.msra.mxu0 %v128
  %136 = vmatpush.msra.mxu0 %v127
  %137 = vmatpush.msra.mxu0 %v126
  %138 = vmatpush.msra.mxu0 %v125
  %139 = vmatpush.msra.mxu0 %v124
  %140 = vmatpush.msra.mxu0 %v123
  %141 = vmatpush.msra.mxu0 %v122
  %142 = vmatpush.msra.mxu0 %v121
  %143 = vmatpush.msra.mxu0 %v120
  %144 = vmatpush.msra.mxu0 %v119
  %145 = vmatpush.msra.mxu0 %v118
  %146 = vmatpush.msra.mxu0 %v117
  %147 = vmatpush.msra.mxu0 %v116
  %148 = vmatmul.f32.gmra.mxu0 %v23
  %v149 = vpop.f32.mrf.mxu0
  %v150 = vadd.f32 0.0, %v149
  %151 = vmatmul.f32.gmra.mxu0 %v24
  %v152 = vpop.f32.mrf.mxu0
  %v153 = vadd.f32 0.0, %v152
  %154 = vdwg.mxu0
  %vm155 = vcmask 523264
  %v157 = vsel %vm155, %v106, 0
  %v160 = vsel %vm155, %v107, 0
  %162 = vmatpush.msra.mxu0 0.0
  %163 = vmatpush.msra.mxu0 0.0
  %164 = vmatpush.msra.mxu0 0.0
  %165 = vmatpush.msra.mxu0 0.0
  %166 = vmatpush.msra.mxu0 0.0
  %167 = vmatpush.msra.mxu0 0.0
  %168 = vmatpush.msra.mxu0 0.0
  %169 = vmatpush.msra.mxu0 0.0
  %170 = vmatpush.msra.mxu0 %v115
  %171 = vmatpush.msra.mxu0 %v114
  %172 = vmatpush.msra.mxu0 %v113
  %173 = vmatpush.msra.mxu0 %v112
  %174 = vmatpush.msra.mxu0 %v111
  %175 = vmatpush.msra.mxu0 %v110
  %176 = vmatpush.msra.mxu0 %v109
  %177 = vmatpush.msra.mxu0 %v108
  %178 = vmatmul.f32.gmra.mxu0 %v157
  %v179 = vpop.f32.mrf.mxu0
  %v180 = vadd.f32 %v150, %v179
  %181 = vmatmul.f32.gmra.mxu0 %v160
  %v182 = vpop.f32.mrf.mxu0
  %v183 = vadd.f32 %v153, %v182
  %184 = vdwg.mxu0
  %v185 = vld [vmem:[%s5] sm:$0x1]
  %v187 = vperm.slane %v185, 0
  %v189 = vadd.f32 %v180, %v187
  %v190 = vadd.f32 %v183, %v187
  %vm191 = vcmask 31744
  %192 = vst.msk [vmem:[%s6] sm:$0xff] %vm191, %v189
  %193 = vst.msk [vmem:[%s6 + $0x8] sm:$0xff] %vm191, %v190
  // Predicated region
  $region26: #{tpu_custom_call.1} parent=0 // pred_check
    _
  $region27: #{tpu_custom_call.1} parent=0 // pred_check_branch
    %195 = sbr.rel (0) target = $region29
  $region28: #{tpu_custom_call.1} parent=0 // pred_region
    _
  $region29: #{tpu_custom_call.1} parent=0 // pred_fallthru
    _
  // Predicated region
  $region30: #{tpu_custom_call.1} parent=0 // pred_check
    _
  $region31: #{tpu_custom_call.1} parent=0 // pred_check_branch
    %197 = sbr.rel (0) target = $region33
  $region32: #{tpu_custom_call.1} parent=0 // pred_region
    _
  $region33: #{tpu_custom_call.1} parent=0 // pred_fallthru
    _

</llo_original>
